<compile_context>
chip_gen: v7x
topology: tpu7x:2x2x1
jax: 0.10.0
libtpu: 0.0.40
codegen_flags: <defaults>
</compile_context>

<pallas_src>
import functools

import numpy as np
import jax
import jax.numpy as jnp
from jax.experimental import pallas as pl
from jax.experimental.pallas import tpu as pltpu

# ----------------------------- static config --------------------------------
H = W = 16
HW = H * W
N = 2
NHW = N * HW
C1 = C2 = 8
E = 1.0
C_ = int(C2 * E)                 # hidden width (== 8 -> residual add active)
GN_GROUPS = 4
GATE_T = 0.5
ALPHA = 0.5
SQUEEZE = 2
GROUP_SIZE = 2                   # groups of the GWC conv
UP_C = int(ALPHA * C_)           # 4
LOW_C = C_ - UP_C                # 4
UP_SQ = UP_C // SQUEEZE          # 2
LOW_SQ = LOW_C // SQUEEZE        # 2
N_PWC2 = C_ - LOW_SQ             # 6
BN_EPS = 1e-5
GN_EPS = 1e-5
ADD = True                       # shortcut and c1 == c2

NTAP = 9
BIAS_COL = NTAP * C_             # 72: column holding the folded biases
KDIM = BIAS_COL + 8              # 80: K of both matmuls (8-sublane aligned)


# ---------------------- pltpu.roll direction probe ---------------------------
@functools.lru_cache(maxsize=None)
def _roll_like_jnp():
    """Tiny device probe (runs once): True iff pltpu.roll(x, s)[i] == x[(i - s) % n]."""
    def k(x_ref, o_ref):
        o_ref[...] = pltpu.roll(x_ref[...], 1, axis=1)

    x = jnp.asarray(np.tile(np.arange(128, dtype=np.float32), (8, 1)))
    y = pl.pallas_call(k, out_shape=jax.ShapeDtypeStruct((8, 128), jnp.float32))(x)
    return bool(np.asarray(y)[0, 0] == 127.0)


# ------------------------------- kernel -------------------------------------
def make_kernel(roll_like_jnp: bool):
    def kernel(x_ref, wcv1_ref, mask_ref, pvec_ref, gmat_ref, wall_ref, o_ref):
        f32 = jnp.float32
        x = x_ref[...]                              # (C1, NHW) input (also residual)

        mask = mask_ref[...]                        # (KDIM, NHW) precomputed on host
        tap_mask = mask[0:BIAS_COL]                 # (72, NHW) per-tap border masks
        ones_blk = mask[BIAS_COL:KDIM]              # (8, NHW): [ones; zeros] bias rows

        pv = pvec_ref[...]                          # (16, 1) packed per-channel vectors
        gn_a = pv[0:C_]                             # gn_gamma * w_gamma
        gn_b = pv[C_:2 * C_]                        # gn_beta  * w_gamma

        def shift_stack(v):
            # (C_, NHW) -> (KDIM, NHW): tap-major stack of the 9 lane-rolled copies,
            # border-masked in a single multiply, plus the constant bias rows.
            pieces = []
            for kh in range(3):
                for kw in range(3):
                    off = (kh - 1) * W + (kw - 1)
                    if off == 0:
                        pieces.append(v)
                    else:
                        shift = (-off) % NHW if roll_like_jnp else off % NHW
                        pieces.append(pltpu.roll(v, shift, axis=1))
            stack = jnp.concatenate(pieces, axis=0) * tap_mask
            return jnp.concatenate([stack, ones_blk], axis=0)

        # ---- cv1: 3x3 conv (BN scale AND bias folded into weights) + SiLU ----
        y = jnp.dot(wcv1_ref[...], shift_stack(x), preferred_element_type=f32)
        y = y * jax.nn.sigmoid(y)                   # SiLU

        # ---- SRU: per-sample GroupNorm (reduce-first, one MXU push) + gating --
        inv_n = 1.0 / ((C_ // GN_GROUPS) * HW)
        cols = []
        for s in range(N):                          # per-sample lane segments
            ys = y[:, s * HW:(s + 1) * HW]
            cols.append(jnp.concatenate(
                [jnp.sum(ys, axis=1, keepdims=True),
                 jnp.sum(ys * ys, axis=1, keepdims=True)], axis=1))
        stats = jnp.concatenate(cols, axis=1)       # (C_, 2N)
        gs = jnp.dot(gmat_ref[...], stats, preferred_element_type=f32) * inv_n

        sru_segs = []
        for s in range(N):
            ys = y[:, s * HW:(s + 1) * HW]
            mean = gs[:, 2 * s:2 * s + 1]
            var = jnp.maximum(gs[:, 2 * s + 1:2 * s + 2] - mean * mean, 0.0)
            inv_std = jax.lax.rsqrt(var + GN_EPS)
            rw = jax.nn.sigmoid((ys - mean) * (inv_std * gn_a) + gn_b)
            w1 = jnp.where(rw > GATE_T, 1.0, rw)
            w2 = jnp.where(rw > GATE_T, 0.0, rw)
            # reconstruct == x1 + half channel rotation of x2
            # (shift C_//2 is direction-symmetric, no probe needed)
            sru_segs.append(w1 * ys + pltpu.roll(w2 * ys, C_ // 2, axis=0))
        sru = jnp.concatenate(sru_segs, axis=1)     # (C_, NHW)

        # ---- CRU: squeeze1/2 + GWC(+bias) + PWC1 + PWC2 fused into one matmul --
        out16 = jnp.dot(wall_ref[...], shift_stack(sru), preferred_element_type=f32)

        # per-sample channel softmax over spatially pooled means, scale, fold halves
        out_segs = []
        for s in range(N):
            seg = out16[:, s * HW:(s + 1) * HW]     # (2*C_, HW)
            m = jnp.mean(seg, axis=1, keepdims=True)
            e = jnp.exp(m - jnp.max(m))
            sm = e * pl.reciprocal(jnp.sum(e, axis=0, keepdims=True), approx=True)
            scaled = sm * seg
            cru = scaled[0:C_] + scaled[C_:2 * C_]
            if ADD:
                cru = cru + x[:, s * HW:(s + 1) * HW]   # bottleneck shortcut
            out_segs.append(cru)

        o_ref[...] = jnp.concatenate(out_segs, axis=1).astype(o_ref.dtype)

    return kernel


# ------------------------------- wrapper -------------------------------------
def bottleneck_scconv(x, params):
    n, c1, h, w = x.shape
    assert (n, c1, h, w) == (N, C1, H, W)
    nhw = n * h * w
    # fuse batch into the lane axis: (N, C, H, W) -> (C, N*HW), sample-major lanes
    x2 = jnp.transpose(x, (1, 0, 2, 3)).reshape(c1, nhw)

    kernel = make_kernel(_roll_like_jnp())

    consts = [params['w_cv1_fold'], params['mask'], params['pvec'],
              params['gmat'], params['w_all']]

    in_specs = [pl.BlockSpec((c1, nhw), lambda i: (0, 0))] + \
               [pl.BlockSpec(a.shape, lambda i: (0, 0)) for a in consts]

    out = pl.pallas_call(
        kernel,
        out_shape=jax.ShapeDtypeStruct((C_, nhw), jnp.float32),
        grid=(1,),                                  # single step: overhead-bound problem
        in_specs=in_specs,
        out_specs=pl.BlockSpec((C_, nhw), lambda i: (0, 0)),
        compiler_params=pltpu.CompilerParams(dimension_semantics=("arbitrary",)),
    )(x2, *consts)
    return jnp.transpose(out.reshape(C_, n, h, w), (1, 0, 2, 3))


# ----------------------------- parameters ------------------------------------
def init_params(key):
    ks = jax.random.split(key, 14)
    f32 = jnp.float32

    def nrm(k, shape, scale):
        return scale * jax.random.normal(k, shape, f32)

    # raw (PyTorch-shaped) parameters
    w_cv1 = nrm(ks[0], (C_, C1, 3, 3), 0.2)
    bn_gamma = 1.0 + 0.1 * jax.random.normal(ks[1], (C_,), f32)
    bn_beta = 0.1 * jax.random.normal(ks[2], (C_,), f32)
    bn_mean = 0.1 * jax.random.normal(ks[3], (C_,), f32)
    bn_var = jax.random.uniform(ks[4], (C_,), f32, 0.5, 1.5)
    gn_gamma = 1.0 + 0.1 * jax.random.normal(ks[5], (C_,), f32)
    gn_beta = 0.1 * jax.random.normal(ks[6], (C_,), f32)
    w_sq1 = nrm(ks[7], (UP_SQ, UP_C, 1, 1), 0.3)
    w_sq2 = nrm(ks[8], (LOW_SQ, LOW_C, 1, 1), 0.3)
    w_gwc = nrm(ks[9], (C_, 1, 3, 3), 0.3)          # grouped: groups=2, 1 in-ch/group
    b_gwc = 0.1 * jax.random.normal(ks[10], (C_,), f32)
    w_pwc1 = nrm(ks[11], (C_, UP_SQ, 1, 1), 0.3)
    w_pwc2 = nrm(ks[12], (N_PWC2, LOW_SQ, 1, 1), 0.3)

    # ---- kernel-ready derived parameters (all folding done on the host) ------
    bn_scale = bn_gamma / jnp.sqrt(bn_var + BN_EPS)
    bn_bias = bn_beta - bn_mean * bn_scale
    w_gamma = gn_gamma / jnp.sum(gn_gamma)
    gn_a = gn_gamma * w_gamma            # GroupNorm gamma folded with SRU's w_gamma
    gn_b = gn_beta * w_gamma

    # cv1 weights (BN scale folded), tap-major columns + bias column (col 72):
    #   w_cv1_fold[co, t*C1 + ci] = bn_scale[co] * w_cv1[co, ci, kh, kw], t = kh*3+kw
    w_cv1_flat = jnp.transpose(w_cv1 * bn_scale[:, None, None, None],
                               (0, 2, 3, 1)).reshape(C_, NTAP * C1)
    w_cv1_fold = np.zeros((C_, KDIM), np.float32)
    w_cv1_fold[:, :NTAP * C1] = np.asarray(w_cv1_flat)
    w_cv1_fold[:, BIAS_COL] = np.asarray(bn_bias)

    # GroupNorm group-membership matrix (C_, C_)
    gmat = np.kron(np.eye(GN_GROUPS, dtype=np.float32),
                   np.ones((C_ // GN_GROUPS, C_ // GN_GROUPS), np.float32))

    # Fused CRU weights (2*C_, KDIM): squeeze1/2, GWC(+bias), PWC1, PWC2 folded
    # into a single matrix applied to the 9-tap shifted stack of the SRU output.
    w_gwc_np = np.asarray(w_gwc)
    w_sq1_np = np.asarray(w_sq1).reshape(UP_SQ, UP_C)
    w_sq2_np = np.asarray(w_sq2).reshape(LOW_SQ, LOW_C)
    w_pwc1_np = np.asarray(w_pwc1).reshape(C_, UP_SQ)
    w_pwc2_np = np.asarray(w_pwc2).reshape(N_PWC2, LOW_SQ)

    w_all = np.zeros((2 * C_, KDIM), np.float32)
    outs_per_group = C_ // GROUP_SIZE
    ctr = 4                                   # center tap (dh = dw = 0)
    for co in range(C_):                      # rows 0..7: Y1 = GWC + PWC1 (through squeeze1)
        g = co // outs_per_group              # grouped-conv input channel of this output
        for kh in range(3):
            for kw in range(3):
                t = kh * 3 + kw
                for ci in range(UP_C):
                    w_all[co, t * C_ + ci] += w_gwc_np[co, 0, kh, kw] * w_sq1_np[g, ci]
        for ci in range(UP_C):                # PWC1 folded through squeeze1 (center tap)
            w_all[co, ctr * C_ + ci] += float(np.dot(w_pwc1_np[co], w_sq1_np[:, ci]))
    pw2sq2 = w_pwc2_np @ w_sq2_np             # (N_PWC2, LOW_C)
    for j in range(N_PWC2):                   # rows 8..13: PWC2(squeeze2(low))
        for ci in range(LOW_C):
            w_all[C_ + j, ctr * C_ + UP_C + ci] = pw2sq2[j, ci]
    for g2 in range(LOW_SQ):                  # rows 14..15: squeeze2(low)
        for ci in range(LOW_C):
            w_all[C_ + N_PWC2 + g2, ctr * C_ + UP_C + ci] = w_sq2_np[g2, ci]
    w_all[0:C_, BIAS_COL] = np.asarray(b_gwc)  # GWC bias folded into column 72

    # Border masks (host-precomputed) from lane % HW so rolls never leak across
    # image boundaries; rows 72..79 = [ones; zeros] bias-row block.
    lane = np.arange(NHW)
    p = lane % HW
    col = p % W
    rows = []
    for kh in range(3):
        for kw in range(3):
            dh, dw = kh - 1, kw - 1
            m = np.ones(NHW, np.float32)
            if dh == -1:
                m = m * (p >= W).astype(np.float32)
            elif dh == 1:
                m = m * (p < (H - 1) * W).astype(np.float32)
            if dw == -1:
                m = m * (col >= 1).astype(np.float32)
            elif dw == 1:
                m = m * (col <= W - 2).astype(np.float32)
            rows.append(np.tile(m[None, :], (C_, 1)))
    mask = np.concatenate(rows, axis=0)                         # (72, NHW)
    bias_rows = np.zeros((KDIM - BIAS_COL, NHW), np.float32)
    bias_rows[0, :] = 1.0
    mask = np.concatenate([mask, bias_rows], axis=0).astype(np.float32)  # (80, NHW)

    # packed per-channel vectors (16, 1): [gn_a; gn_b]
    pvec = np.concatenate([np.asarray(gn_a), np.asarray(gn_b)]).reshape(-1, 1)

    return dict(
        # raw (reference)
        w_cv1=w_cv1, bn_gamma=bn_gamma, bn_beta=bn_beta, bn_mean=bn_mean,
        bn_var=bn_var, gn_gamma=gn_gamma, gn_beta=gn_beta, w_sq1=w_sq1,
        w_sq2=w_sq2, w_gwc=w_gwc, b_gwc=b_gwc, w_pwc1=w_pwc1, w_pwc2=w_pwc2,
        # kernel-ready
        w_cv1_fold=jnp.asarray(w_cv1_fold),
        mask=jnp.asarray(mask),
        pvec=jnp.asarray(pvec),
        gmat=jnp.asarray(gmat),
        w_all=jnp.asarray(w_all),
    )


# ------------------------ pure-JAX reference (NCHW) ---------------------------
def reference_forward(x, p):
    def conv2d(xx, ww, b=None, padding=0, groups=1):
        out = jax.lax.conv_general_dilated(
            xx, ww, (1, 1), [(padding, padding), (padding, padding)],
            feature_group_count=groups,
            dimension_numbers=('NCHW', 'OIHW', 'NCHW'))
        if b is not None:
            out = out + b[None, :, None, None]
        return out

    # cv1: conv + BN(eval) + SiLU
    y = conv2d(x, p['w_cv1'], padding=1)
    scale = p['bn_gamma'] / jnp.sqrt(p['bn_var'] + BN_EPS)
    y = (y - p['bn_mean'][None, :, None, None]) * scale[None, :, None, None] \
        + p['bn_beta'][None, :, None, None]
    y = y * jax.nn.sigmoid(y)

    # SRU
    n, c, h, w = y.shape
    yg = y.reshape(n, GN_GROUPS, -1)
    mean = yg.mean(axis=2, keepdims=True)
    var = yg.var(axis=2, keepdims=True)
    gn = ((yg - mean) / jnp.sqrt(var + GN_EPS)).reshape(n, c, h, w)
    gn = gn * p['gn_gamma'][None, :, None, None] + p['gn_beta'][None, :, None, None]
    wg = p['gn_gamma'] / jnp.sum(p['gn_gamma'])
    rw = jax.nn.sigmoid(gn * wg[None, :, None, None])
    w1 = jnp.where(rw > GATE_T, 1.0, rw)
    w2 = jnp.where(rw > GATE_T, 0.0, rw)
    x1, x2 = w1 * y, w2 * y
    half = c // 2
    sru = jnp.concatenate([x1[:, :half] + x2[:, half:],
                           x1[:, half:] + x2[:, :half]], axis=1)

    # CRU
    up, low = sru[:, :UP_C], sru[:, UP_C:]
    up = conv2d(up, p['w_sq1'])
    low = conv2d(low, p['w_sq2'])
    Y1 = conv2d(up, p['w_gwc'], b=p['b_gwc'], padding=1, groups=GROUP_SIZE) \
        + conv2d(up, p['w_pwc1'])
    Y2 = jnp.concatenate([conv2d(low, p['w_pwc2']), low], axis=1)
    out = jnp.concatenate([Y1, Y2], axis=1)
    pooled = out.mean(axis=(2, 3), keepdims=True)
    sm = jax.nn.softmax(pooled, axis=1)
    out = sm * out
    cru = out[:, :C_] + out[:, C_:]
    return x + cru if ADD else cru


# --------------------------------- main ---------------------------------------
if __name__ == "__main__":
    key = jax.random.PRNGKey(0)
    kx, kp = jax.random.split(key)
    x = jax.random.normal(kx, (N, C1, H, W), jnp.float32)
    params = init_params(kp)

    out = bottleneck_scconv(x, params)
    out = jax.block_until_ready(out)

    ref = reference_forward(x, params)
    np.testing.assert_allclose(np.asarray(out), np.asarray(ref), rtol=2e-2, atol=2e-2)
    print("KERNEL_OK")
</pallas_src>

<mosaic_0001>
module attributes {stable_mosaic.version = 11 : i64} {
  func.func @k(%arg0: memref<8x128xf32, #tpu.memory_space<vmem>>, %arg1: memref<8x128xf32, #tpu.memory_space<vmem>>) attributes {dimension_semantics = [], scalar_prefetch = 0 : i64, scratch_operands = 0 : i64, tpu.core_type = #tpu.core_type<tc>} {
    %c0 = arith.constant 0 : index
    %c0_0 = arith.constant 0 : index
    %0 = vector.load %arg0[%c0, %c0_0] : memref<8x128xf32, #tpu.memory_space<vmem>>, vector<8x128xf32>
    %c1_i32 = arith.constant 1 : i32
    %1 = tpu.dynamic_rotate %0 by %c1_i32 dim 1 : vector<8x128xf32>, i32 -> vector<8x128xf32>
    %c0_1 = arith.constant 0 : index
    %c0_2 = arith.constant 0 : index
    %2 = vector.load %arg1[%c0_1, %c0_2] : memref<8x128xf32, #tpu.memory_space<vmem>>, vector<8x128xf32>
    tpu.vector_store %arg1[%c0_1, %c0_2], %1 {strides = array<i32>} : memref<8x128xf32, #tpu.memory_space<vmem>>, vector<8x128xf32>,
    return
  }
}

</mosaic_0001>

<llo_original>
// kernel: tpu_custom_call.1
$region0: #{tpu_custom_call.1}
  #allocation0 [shape = 'u32[]', space=smem, size = 0x4, offset = 0x4, fixed_abs, tag = 'smem constant byte address 0x4 - core index']
  #allocation1 [shape = 'u32[144,128]{1,0:T(1,128)}', space=vmem, size = 0x12000, scoped, tag = 'internal scratch']
  %s0 = inlined_call_operand.hbm [shape: f32[8,128], index: 0, kind: input, shape index: {}]
  %s1 = inlined_call_operand.hbm [shape: f32[8,128], index: 1, kind: output, shape index: {}]
  %s2 = sld [smem:[#allocation0]]
  $region18: #{tpu_custom_call.1} parent=0
    _
  %s4 = ssub.s32 1, %s2
  %s5 = scalar_select 0, %s4, %s2
  $region1: #{tpu_custom_call.1} parent=0
    #allocation2 [shape = 'u8[4096]{0}', space=vmem, size = 0x1000, scoped, tag = 'input window, operand 0, single buffered']
    #allocation3 [shape = 's32[1]{0}', space=sflag, size = 0x4, scoped, tag = 'scoped memory for tpu_custom_call.1']
    #allocation4 [shape = 's32[1]{0}', space=sflag, size = 0x4, scoped, tag = 'scoped memory for tpu_custom_call.1']
    #allocation5 [shape = 'u8[4096]{0}', space=vmem, size = 0x1000, scoped, tag = 'output window, operand 0, single buffered']
    %6 = vsyncpa [#allocation3], 0
    %7 = vsyncpa [#allocation4], 0
    // Predicated region
    $region2: #{tpu_custom_call.1} parent=1 // pred_check
      _
    $region3: #{tpu_custom_call.1} parent=1 // pred_check_branch
      %9 = sbr.rel (0) target = $region5
    $region4: #{tpu_custom_call.1} parent=1 // pred_region
      %s11 = ssub.s32 128, 128
      %12 = vsyncadd [#allocation3], %s11
      %s14 = sshll.u32 [#allocation2], 4
      %s15 = int_to_ptr.vmem [resolvable:$true] %s14
      %17 = dma.hbm_to_vmem [thread:$0]  %s0, 128, %s15, [#allocation3]
    $region5: #{tpu_custom_call.1} parent=1 // pred_fallthru
      _
    // Predicated region
    $region6: #{tpu_custom_call.1} parent=1 // pred_check
      _
    $region7: #{tpu_custom_call.1} parent=1 // pred_check_branch
      %19 = sbr.rel (0) target = $region9
    $region8: #{tpu_custom_call.1} parent=1 // pred_region
      %20 = dma.done [#allocation3], 128
    $region9: #{tpu_custom_call.1} parent=1 // pred_fallthru
      _
    %v21 = vld [vmem:[#allocation2] sm:$0xff]
    %22 = vrot.lane.b32.xlu0 %v21, 1
    %v23 = vpop.permute.xlu0 %22
    %24 = vst [vmem:[#allocation5] sm:$0xff] %v23
    // Predicated region
    $region10: #{tpu_custom_call.1} parent=1 // pred_check
      _
    $region11: #{tpu_custom_call.1} parent=1 // pred_check_branch
      %26 = sbr.rel (0) target = $region13
    $region12: #{tpu_custom_call.1} parent=1 // pred_region
      %s28 = ssub.s32 128, 128
      %29 = vsyncadd [#allocation4], %s28
      %s31 = sshll.u32 [#allocation5], 4
      %s32 = int_to_ptr.vmem [resolvable:$true] %s31
      %34 = dma.vmem_to_hbm [thread:$0]  %s32, 128, %s1, [#allocation4]
    $region13: #{tpu_custom_call.1} parent=1 // pred_fallthru
      _
    // Predicated region
    $region14: #{tpu_custom_call.1} parent=1 // pred_check
      _
    $region15: #{tpu_custom_call.1} parent=1 // pred_check_branch
      %36 = sbr.rel (0) target = $region17
    $region16: #{tpu_custom_call.1} parent=1 // pred_region
      %37 = dma.done [#allocation4], 128
    $region17: #{tpu_custom_call.1} parent=1 // pred_fallthru
      _
    %38 = vsyncpa [#allocation3], 1
    %39 = vsyncpa [#allocation4], 1

</llo_original>
